<compile_context>
chip_gen: v7x
topology: tpu7x:2x2x1
jax: 0.10.0
libtpu: 0.0.40
codegen_flags: <defaults>
</compile_context>

<pallas_src>
import functools
import math

import jax
import jax.numpy as jnp
from jax import lax
from jax.experimental import pallas as pl
from jax.experimental.pallas import tpu as pltpu


def _round_up(x, m):
    return -(-x // m) * m


def _sinusoidal_kernel(t_ref, o_ref, *, half, scale):
    """t_ref: (TB, 1) f32 timesteps; o_ref: (TB, dim) f32, dim = 2*half."""
    t = t_ref[...]                                                # (TB, 1)
    dim = o_ref.shape[1]
    # Per-lane constants computed once per block over a (1, dim) row.
    lane = lax.broadcasted_iota(jnp.int32, (1, dim), 1)           # (1, dim)
    is_sin = lane < half
    k = jnp.where(is_sin, lane, lane - half).astype(jnp.float32)  # freq index
    freqs = jnp.exp(k * jnp.float32(-scale))                      # (1, dim), EUP
    # cos(x) = sin(x + pi/2): single transcendental per lane, unmasked store.
    phase = jnp.where(is_sin, jnp.float32(0.0), jnp.float32(math.pi / 2.0))
    o_ref[...] = jnp.sin(t * freqs + phase)                       # (TB,1)*(1,dim)


def _pick_block_b(batch, max_block=512):
    """Large blocks (few-hundred rows), multiple of 8, >=2 grid steps when possible."""
    b8 = _round_up(max(batch, 1), 8)
    if b8 <= 8:
        return 8
    # Aim for at least 2 grid steps so v7x can use both TensorCores, while
    # keeping blocks as large as possible (cap at max_block rows).
    half_rows = _round_up(-(-b8 // 2), 8)
    return min(max_block, max(8, half_rows))


def sinusoidal_position_embeddings(t, dim, *, block_b=None):
    """Matches SinusoidalPositionEmbeddings.forward(t) -> (B, dim) float32."""
    assert dim % 2 == 0, "dim must be even"
    assert dim >= 4, "dim must be >= 4 (half_dim - 1 == 0 divides by zero in reference)"
    half = dim // 2
    # Matches the PyTorch reference: log(10000) / (half_dim - 1).
    scale = math.log(10000.0) / (half - 1)

    t2d = t.astype(jnp.float32).reshape(-1, 1)                    # (B, 1)
    B = t2d.shape[0]
    if block_b is None:
        block_b = _pick_block_b(B)
    block_b = _round_up(block_b, 8)
    Bp = _round_up(B, block_b)
    if Bp != B:                                                   # pad batch to block multiple
        t2d = jnp.pad(t2d, ((0, Bp - B), (0, 0)))

    out = pl.pallas_call(
        functools.partial(_sinusoidal_kernel, half=half, scale=scale),
        out_shape=jax.ShapeDtypeStruct((Bp, dim), jnp.float32),
        grid_spec=pltpu.PrefetchScalarGridSpec(
            num_scalar_prefetch=0,
            grid=(Bp // block_b,),
            in_specs=[pl.BlockSpec((block_b, 1), lambda i: (i, 0))],
            out_specs=pl.BlockSpec((block_b, dim), lambda i: (i, 0)),
        ),
        compiler_params=pltpu.CompilerParams(
            dimension_semantics=("parallel",)),                   # shard batch across TCs (v7x)
    )(t2d)
    return out[:B]


def _reference(t, dim):
    """Pure-JAX port of the PyTorch module, for correctness checking."""
    half = dim // 2
    scale = math.log(10000.0) / (half - 1)
    freqs = jnp.exp(jnp.arange(half, dtype=jnp.float32) * -scale)
    arg = t[:, None].astype(jnp.float32) * freqs[None, :]
    return jnp.concatenate([jnp.sin(arg), jnp.cos(arg)], axis=1)


if __name__ == "__main__":
    key = jax.random.PRNGKey(0)

    # Case 1: lane-dense dim (one full vreg per 8 rows), batch = 8.
    B1, dim1 = 8, 128
    t1 = jax.random.randint(key, (B1,), 0, 1000).astype(jnp.float32)
    out1 = jax.block_until_ready(sinusoidal_position_embeddings(t1, dim1))
    ref1 = _reference(t1, dim1)
    assert out1.shape == (B1, dim1)
    assert bool(jnp.all(jnp.isfinite(out1)))
    err1 = float(jnp.max(jnp.abs(out1 - ref1)))
    assert err1 < 5e-3, f"case1 max abs err vs reference: {err1}"

    # Case 2: batch not a multiple of 8 (exercises padding path), smaller dim.
    B2, dim2 = 5, 64
    t2 = jax.random.randint(jax.random.PRNGKey(1), (B2,), 0, 1000).astype(jnp.float32)
    out2 = jax.block_until_ready(sinusoidal_position_embeddings(t2, dim2))
    ref2 = _reference(t2, dim2)
    assert out2.shape == (B2, dim2)
    assert bool(jnp.all(jnp.isfinite(out2)))
    err2 = float(jnp.max(jnp.abs(out2 - ref2)))
    assert err2 < 5e-3, f"case2 max abs err vs reference: {err2}"

    print("KERNEL_OK")
</pallas_src>

<mosaic_0001>
module attributes {stable_mosaic.version = 11 : i64} {
  func.func @_sinusoidal_kernel(%arg0: i32, %arg1: memref<8x1xf32, #tpu.memory_space<vmem>>, %arg2: memref<8x128xf32, #tpu.memory_space<vmem>>) attributes {dimension_semantics = [#tpu.dimension_semantics<parallel>], iteration_bounds = array<i64: 1>, scalar_prefetch = 0 : i64, scratch_operands = 0 : i64, tpu.core_type = #tpu.core_type<tc>, window_params = [{transform_indices = @transform_0, window_bounds = array<i64: 8, 1>}, {transform_indices = @transform_1, window_bounds = array<i64: 8, 128>}]} {
    %c0 = arith.constant 0 : index
    %c0_0 = arith.constant 0 : index
    %0 = vector.load %arg1[%c0, %c0_0] : memref<8x1xf32, #tpu.memory_space<vmem>>, vector<8x1xf32>
    %1 = tpu.iota {dimensions = array<i32: 1>} : vector<1x128xi32>
    %c64_i32 = arith.constant 64 : i32
    %2 = vector.broadcast %c64_i32 : i32 to vector<1x128xi32>
    %3 = arith.cmpi slt, %1, %2 : vector<1x128xi32>
    %c64_i32_1 = arith.constant 64 : i32
    %4 = vector.broadcast %c64_i32_1 : i32 to vector<1x128xi32>
    %5 = arith.subi %1, %4 : vector<1x128xi32>
    %6 = arith.select %3, %1, %5 : vector<1x128xi1>, vector<1x128xi32>
    %7 = arith.sitofp %6 : vector<1x128xi32> to vector<1x128xf32>
    %cst = arith.constant -0.146195874 : f32
    %8 = vector.broadcast %cst : f32 to vector<1x128xf32>
    %9 = arith.mulf %7, %8 : vector<1x128xf32>
    %10 = math.exp %9 : vector<1x128xf32>
    %cst_2 = arith.constant 0.000000e+00 : f32
    %cst_3 = arith.constant 1.57079637 : f32
    %11 = vector.broadcast %cst_2 : f32 to vector<1x128xf32>
    %12 = vector.broadcast %cst_3 : f32 to vector<1x128xf32>
    %13 = arith.select %3, %11, %12 : vector<1x128xi1>, vector<1x128xf32>
    %14 = vector.broadcast %0 : vector<8x1xf32> to vector<8x128xf32>
    %15 = vector.broadcast %10 : vector<1x128xf32> to vector<8x128xf32>
    %16 = arith.mulf %14, %15 : vector<8x128xf32>
    %17 = vector.broadcast %13 : vector<1x128xf32> to vector<8x128xf32>
    %18 = arith.addf %16, %17 : vector<8x128xf32>
    %19 = math.sin %18 : vector<8x128xf32>
    %c0_4 = arith.constant 0 : index
    %c0_5 = arith.constant 0 : index
    %20 = vector.load %arg2[%c0_4, %c0_5] : memref<8x128xf32, #tpu.memory_space<vmem>>, vector<8x128xf32>
    tpu.vector_store %arg2[%c0_4, %c0_5], %19 {strides = array<i32>} : memref<8x128xf32, #tpu.memory_space<vmem>>, vector<8x128xf32>,
    return
  }
  func.func @transform_0(%arg0: i32) -> (i32, i32) {
    %c0_i32 = arith.constant 0 : i32
    %c0_i32_0 = arith.constant 0 : i32
    return %arg0, %c0_i32 : i32, i32
  }
  func.func @transform_1(%arg0: i32) -> (i32, i32) {
    %c0_i32 = arith.constant 0 : i32
    %c0_i32_0 = arith.constant 0 : i32
    return %arg0, %c0_i32 : i32, i32
  }
}

</mosaic_0001>

<llo_original>
// kernel: tpu_custom_call.1
$region0: #{tpu_custom_call.1}
  #allocation0 [shape = 'u32[]', space=smem, size = 0x4, offset = 0x4, fixed_abs, tag = 'smem constant byte address 0x4 - core index']
  #allocation1 [shape = 'u32[144,128]{1,0:T(1,128)}', space=vmem, size = 0x12000, scoped, tag = 'internal scratch']
  %s0 = inlined_call_operand.vmem [shape: f32[8,1], index: 0, kind: input, shape index: {}]
  %s1 = inlined_call_operand.hbm [shape: f32[8,128], index: 1, kind: output, shape index: {}]
  %s2 = sld [smem:[#allocation0]]
  $region14: #{tpu_custom_call.1} parent=0
    _
  %s4 = ssub.s32 1, %s2
  %s5 = scalar_select 0, %s4, %s2
  $region1: #{tpu_custom_call.1} parent=0
    #allocation2 [shape = 'u8[4096]{0}', space=vmem, size = 0x1000, scoped, tag = 'output window, operand 0, single buffered']
    #allocation3 [shape = 's32[1]{0}', space=sflag, size = 0x4, scoped, tag = 'scoped memory for tpu_custom_call.1']
    %6 = vsyncpa [#allocation3], 0
    // Predicated region
    $region2: #{tpu_custom_call.1} parent=1 // pred_check
      _
    $region3: #{tpu_custom_call.1} parent=1 // pred_check_branch
      %8 = sbr.rel (0) target = $region5
    $region4: #{tpu_custom_call.1} parent=1 // pred_region
      _
    $region5: #{tpu_custom_call.1} parent=1 // pred_fallthru
      _
    %v9 = vld [vmem:[%s0] sm:$0xff]
    %v10 = vlaneseq
    %v11 = vand.u32 %v10, 127
    %vm12 = vcmp.lt.s32.totalorder %v11, 64
    %v13 = vsub.s32 %v11, 64
    %v14 = vsel %vm12, %v11, %v13
    %v15 = vcvt.s32.f32 %v14
    %v16 = vmul.f32 %v15, -0.14619587
    %v17 = vmul.f32 %v16, 1.442695
    %v18 = vpow.pop %v17
    %v19 = vsel %vm12, 0.0, 1.5707964
    %21 = vset.pattern.permute.xlu0 0
    %22 = vperm.xlu0 %21, %v9
    %v23 = vpop.permute.xlu0 %22
    %v25 = vmul.f32 %v23, %v18
    %v26 = vadd.f32 %v25, %v19
    %v27 = vand.u32 2147483647, %v26
    %vm28 = vcmp.le.f32.partialorder %v27, 0.7853982
    %vm29 = vcmp.lt.s32.totalorder %v26, 0
    %v30 = vand.u32 %v26, 2139095040
    %v31 = vshrl.u32 %v30, 23
    %v32 = vsub.s32 %v31, 127
    %v33 = vand.u32 2147483647, %v26
    %v34 = vand.u32 %v33, 8388607
    %v35 = vor.u32 %v34, 8388608
    %v36 = vsub.s32 0, %v35
    %v37 = vadd.s32 %v32, 1
    %vm38 = vcmp.gt.s32.totalorder %v37, 0
    %v39 = vsel %vm38, %v37, 0
    %v40 = vshrl.u32 %v39, 5
    %v41 = vand.u32 %v39, 31
    %v42 = vsub.s32 32, %v41
    %v43 = vshrl.u32 683565275, %v42
    %v44 = vshll.u32 683565275, %v41
    %v45 = vshrl.u32 2475754826, %v42
    %v46 = vor.u32 %v44, %v45
    %v47 = vshll.u32 2475754826, %v41
    %v48 = vshrl.u32 2131351028, %v42
    %v49 = vor.u32 %v47, %v48
    %v50 = vshll.u32 2131351028, %v41
    %v51 = vshrl.u32 2102212464, %v42
    %v52 = vor.u32 %v50, %v51
    %v53 = vshll.u32 2102212464, %v41
    %v54 = vshrl.u32 920167782, %v42
    %v55 = vor.u32 %v53, %v54
    %v56 = vshll.u32 920167782, %v41
    %v57 = vshrl.u32 1326507024, %v42
    %v58 = vor.u32 %v56, %v57
    %vm59 = vcmp.lt.s32.totalorder %v40, 1
    %vm60 = vcmp.lt.s32.totalorder %v40, 2
    %vm61 = vcmp.lt.s32.totalorder %v40, 3
    %vm62 = vcmp.lt.s32.totalorder %v40, 4
    %v63 = vsel %vm59, %v43, %v46
    %v64 = vsel %vm62, %v52, 2102212464
    %v65 = vsel %vm61, %v49, %v64
    %v66 = vsel %vm60, %v63, %v65
    %v67 = vsel %vm59, %v46, %v49
    %v68 = vsel %vm62, %v55, 920167782
    %v69 = vsel %vm61, %v52, %v68
    %v70 = vsel %vm60, %v67, %v69
    %v71 = vsel %vm59, %v49, %v52
    %v72 = vsel %vm62, %v58, 1326507024
    %v73 = vsel %vm61, %v55, %v72
    %v74 = vsel %vm60, %v71, %v73
    %v75 = vshll.u32 %v35, 8
    %v76 = vmul.u32.u64.compose %v75, %v74
    %v77 = vextract.low.u32 %v76
    %v78 = vextract.high.u32 %v76
    %v79 = vmul.u32.u64.compose %v75, %v70
    %v80 = vextract.low.u32 %v79
    %v81 = vextract.high.u32 %v79
    %v82 = vmul.u32 %v75, %v66
    %v83 = vadd.s32 %v78, %v80
    %vm84 = vc.u32 %v78, %v80
    %v85 = vadd.s32 %v81, 1
    %v86 = vsel %vm84, %v85, %v81
    %v87 = vadd.s32 %v82, %v86
    %v88 = vadd.s32 %v87, 536870912
    %v89 = vshrl.u32 %v88, 30
    %v90 = vshll.u32 %v89, 30
    %v91 = vsub.s32 %v87, %v90
    %vm92 = vcmp.lt.s32.totalorder %v91, 0
    %v93 = vsub.s32 0, %v91
    %v94 = vsel %vm92, %v93, %v91
    %v95 = vclz %v94
    %v96 = vsub.s32 %v95, 2
    %vm97 = vcmp.gt.s32.totalorder 0, %v96
    %v98 = vsel %vm97, 0, %v96
    %v99 = vsub.s32 32, %v98
    %v100 = vshll.u32 %v91, %v98
    %v101 = vshrl.u32 %v83, %v99
    %v102 = vor.u32 %v100, %v101
    %v103 = vsub.s32 4294967266, %v98
    %v104 = vadd.s32 %v103, 127
    %v105 = vshll.u32 %v104, 23
    %v106 = vor.u32 4788187, %v105
    %v107 = vand.u32 2147483647, %v106
    %v109 = vcvt.s32.f32 %v102
    %v110 = vmul.f32 %v109, %v107
    %v111 = vxor.u32 %v110, 2147483648
    %v112 = vsel %vm29, %v111, %v110
    %v113 = vsub.s32 4, %v89
    %v114 = vsel %vm29, %v113, %v89
    %v115 = vsel %vm28, %v26, %v112
    %v116 = vsel %vm28, 0, %v114
    %v117 = vcosq.f32.pop %v115
    %v118 = vsinq.f32.pop %v115
    %vm119 = vweird.f32 %v26
    %v120 = vadd.s32 %v116, 3
    %v121 = vand.u32 %v120, 3
    %vm122 = vcmp.lt.s32.totalorder %v121, 2
    %vm123 = vcmp.eq.s32.totalorder %v121, 0
    %v124 = vxor.u32 %v118, 2147483648
    %v125 = vsel %vm123, %v117, %v124
    %vm126 = vcmp.eq.s32.totalorder %v121, 2
    %v127 = vxor.u32 %v117, 2147483648
    %v128 = vsel %vm126, %v127, %v118
    %v129 = vsel %vm122, %v125, %v128
    %v130 = vsel %vm119, nan, %v129
    %131 = vst [vmem:[#allocation2] sm:$0xff] %v130
    // Predicated region
    $region6: #{tpu_custom_call.1} parent=1 // pred_check
      _
    $region7: #{tpu_custom_call.1} parent=1 // pred_check_branch
      %133 = sbr.rel (0) target = $region9
    $region8: #{tpu_custom_call.1} parent=1 // pred_region
      %s135 = ssub.s32 128, 128
      %136 = vsyncadd [#allocation3], %s135
      %s138 = sshll.u32 [#allocation2], 4
      %s139 = int_to_ptr.vmem [resolvable:$true] %s138
      %141 = dma.vmem_to_hbm [thread:$0]  %s139, 128, %s1, [#allocation3]
    $region9: #{tpu_custom_call.1} parent=1 // pred_fallthru
      _
    // Predicated region
    $region10: #{tpu_custom_call.1} parent=1 // pred_check
      _
    $region11: #{tpu_custom_call.1} parent=1 // pred_check_branch
      %143 = sbr.rel (0) target = $region13
    $region12: #{tpu_custom_call.1} parent=1 // pred_region
      %144 = dma.done [#allocation3], 128
    $region13: #{tpu_custom_call.1} parent=1 // pred_fallthru
      _
    %145 = vsyncpa [#allocation3], 1

</llo_original>
